<compile_context>
chip_gen: v5e
topology: v5e:2x2
jax: 0.10.0
libtpu: 0.0.40
codegen_flags: <defaults>
</compile_context>

<pallas_src>
import functools
import math

import jax
import jax.numpy as jnp
from jax.experimental import pallas as pl
from jax.experimental.pallas import tpu as pltpu

_EPS = 1e-5


def _compiler_params(semantics):
    return pltpu.CompilerParams(
        dimension_semantics=semantics,
        vmem_limit_bytes=32 * 1024 * 1024,   # fits scoped VMEM on v5e/v6e/v7x
    )


def _pick_hw_tile(hw):
    """Largest tile <= 2048 that divides H*W and is a multiple of 128."""
    for t in (2048, 1024, 512, 256, 128):
        if hw % t == 0:
            return t
    return hw


# --------------------------- pass 1: input stats ----------------------------
def _xstats_kernel(x_ref, s_ref):
    # x_ref: (1, C, HW) block of the selected input; s_ref: (1, C, 2) partials.
    x = x_ref[0].astype(jnp.float32)                       # (C, HW)
    s0 = jnp.sum(x, axis=1, keepdims=True)                 # (C, 1)
    s1 = jnp.sum(x * x, axis=1, keepdims=True)             # (C, 1)
    s_ref[0] = jnp.concatenate([s0, s1], axis=1)           # (C, 2)


def _input_stats(x_ncp):
    n, c, hw = x_ncp.shape
    return pl.pallas_call(
        _xstats_kernel,
        grid=(n,),
        in_specs=[pl.BlockSpec((1, c, hw), lambda i: (i, 0, 0))],
        out_specs=pl.BlockSpec((1, c, 2), lambda i: (i, 0, 0)),
        out_shape=jax.ShapeDtypeStruct((n, c, 2), jnp.float32),
        compiler_params=_compiler_params(("parallel",)),
    )(x_ncp)


# ------------------ pass 2: BN1 + ReLU + 1x1 conv + y stats ------------------
def _conv1_kernel(x_ref, sc_ref, bi_ref, w1_ref, y_ref, ys_ref):
    # x_ref: (1, Cin, T)   sc/bi: (Cin, 1) f32   w1: (C1, Cin) bf16
    # y_ref: (1, C1, T) f32   ys_ref: (1, 1, C1, 2) partial stats of y.
    x = x_ref[0].astype(jnp.float32)
    h1 = jnp.maximum(x * sc_ref[...] + bi_ref[...], 0.0)        # fused BN1+ReLU
    y = jnp.dot(w1_ref[...], h1.astype(jnp.bfloat16),
                preferred_element_type=jnp.float32)             # (C1, T) on MXU
    y_ref[0] = y
    s0 = jnp.sum(y, axis=1, keepdims=True)
    s1 = jnp.sum(y * y, axis=1, keepdims=True)
    ys_ref[0, 0] = jnp.concatenate([s0, s1], axis=1)            # (C1, 2)


def _conv1_pass(x_ncp, scale1, bias1, w1t_bf16):
    n, cin, hw = x_ncp.shape
    c1 = w1t_bf16.shape[0]
    t = _pick_hw_tile(hw)
    nt = hw // t
    y, ypart = pl.pallas_call(
        _conv1_kernel,
        grid=(n, nt),
        in_specs=[
            pl.BlockSpec((1, cin, t), lambda i, j: (i, 0, j)),
            pl.BlockSpec((cin, 1), lambda i, j: (0, 0)),
            pl.BlockSpec((cin, 1), lambda i, j: (0, 0)),
            pl.BlockSpec((c1, cin), lambda i, j: (0, 0)),
        ],
        out_specs=(
            pl.BlockSpec((1, c1, t), lambda i, j: (i, 0, j)),
            pl.BlockSpec((1, 1, c1, 2), lambda i, j: (i, j, 0, 0)),
        ),
        out_shape=(
            jax.ShapeDtypeStruct((n, c1, hw), jnp.float32),
            jax.ShapeDtypeStruct((n, nt, c1, 2), jnp.float32),
        ),
        compiler_params=_compiler_params(("parallel", "parallel")),
    )(x_ncp, scale1, bias1, w1t_bf16)
    return y, ypart


# ------------- pass 3: BN2 + ReLU + 3x3 conv via masked im2col --------------
def _conv2_kernel(y_ref, sc_ref, bi_ref, w2_ref, o_ref, *, width):
    # y_ref: (1, C1, HW)   sc/bi: (C1, 1)   w2: (Cout, 9*C1) bf16
    # o_ref: (1, Cout, HW) f32  (lane-dense output block)
    c1, hw = y_ref.shape[1], y_ref.shape[2]
    y = y_ref[0]
    h2 = jnp.maximum(y * sc_ref[...] + bi_ref[...], 0.0)        # fused BN2+ReLU
    h2 = h2.astype(jnp.bfloat16)

    # 1-row flat zero halo handles all h-boundary taps; w-boundary taps are
    # masked with an iota-derived column mask (no padded VMEM scratch).
    zpad = jnp.zeros((c1, width + 1), jnp.bfloat16)
    hp = jnp.concatenate([zpad, h2, zpad], axis=1)              # (C1, HW+2W+2)
    col = jax.lax.broadcasted_iota(jnp.int32, (1, hw), 1) % width

    taps = []
    for dy in range(3):
        for dx in range(3):
            shift = (dy - 1) * width + (dx - 1)
            tap = hp[:, shift + width + 1: shift + width + 1 + hw]  # (C1, HW)
            if dx == 0:                         # needs source column w-1
                tap = jnp.where(col >= 1, tap, 0)
            elif dx == 2:                       # needs source column w+1
                tap = jnp.where(col < width - 1, tap, 0)
            taps.append(tap)
    patches = jnp.concatenate(taps, axis=0)                     # (9*C1, HW)

    o_ref[0] = jnp.dot(w2_ref[...], patches,
                       preferred_element_type=jnp.float32)      # (Cout, HW)


def _conv2_pass(y_ncp, scale2, bias2, w2t_bf16, width):
    n, c1, hw = y_ncp.shape
    cout = w2t_bf16.shape[0]
    kernel = functools.partial(_conv2_kernel, width=width)
    return pl.pallas_call(
        kernel,
        grid=(n,),
        in_specs=[
            pl.BlockSpec((1, c1, hw), lambda i: (i, 0, 0)),
            pl.BlockSpec((c1, 1), lambda i: (0, 0)),
            pl.BlockSpec((c1, 1), lambda i: (0, 0)),
            pl.BlockSpec((cout, 9 * c1), lambda i: (0, 0)),
        ],
        out_specs=pl.BlockSpec((1, cout, hw), lambda i: (i, 0, 0)),
        out_shape=jax.ShapeDtypeStruct((n, cout, hw), jnp.float32),
        compiler_params=_compiler_params(("parallel",)),
    )(y_ncp, scale2, bias2, w2t_bf16)


# --------------------------------- wrapper ----------------------------------
def _fold_bn(sums, count, gamma, beta):
    """Fold batch stats + affine into per-channel scale/bias (f32, (C,1))."""
    mean = sums[:, 0] / count
    var = jnp.maximum(sums[:, 1] / count - mean * mean, 0.0)    # biased var
    scale = gamma * jax.lax.rsqrt(var + _EPS)
    bias = beta - mean * scale
    return (scale[:, None].astype(jnp.float32),
            bias[:, None].astype(jnp.float32))


def bottleneck_block(x_nchw, params, in_planes, growth_rate, layer_idx):
    """channel select (glue) -> 3 Pallas passes -> concat (glue)."""
    g1, b1, w1_oihw, g2, b2, w2_oihw = params
    n, _, h, w = x_nchw.shape
    if layer_idx > 1:
        inp = jnp.concatenate(
            [x_nchw[:, :in_planes], x_nchw[:, -growth_rate:]], axis=1)
    else:
        inp = x_nchw
    cin = inp.shape[1]
    hw = h * w
    x_ncp = inp.reshape(n, cin, hw)            # free reshape: NCHW contiguous

    c1 = w1_oihw.shape[0]
    cout = w2_oihw.shape[0]
    w1t = w1_oihw[:, :, 0, 0].astype(jnp.bfloat16)              # (C1, Cin)
    w2t = jnp.transpose(w2_oihw, (0, 2, 3, 1)).reshape(cout, 9 * c1)
    w2t = w2t.astype(jnp.bfloat16)                              # (Cout, 9*C1)

    count = float(n * hw)

    # pass 1: partial stats of the selected input -> fold BN1 into scale/bias
    xpart = _input_stats(x_ncp)                                 # (N, Cin, 2)
    scale1, bias1 = _fold_bn(jnp.sum(xpart, axis=0), count, g1, b1)

    # pass 2: BN1+ReLU+1x1 conv (bf16 MXU) + partial stats of y -> fold BN2
    y, ypart = _conv1_pass(x_ncp, scale1, bias1, w1t)           # y: (N,C1,HW)
    scale2, bias2 = _fold_bn(jnp.sum(ypart, axis=(0, 1)), count, g2, b2)

    # pass 3: BN2+ReLU+3x3 conv as a single masked-im2col matmul
    out = _conv2_pass(y, scale2, bias2, w2t, w)                 # (N,Cout,HW)
    out_nchw = out.reshape(n, cout, h, w)

    return jnp.concatenate([x_nchw, out_nchw], axis=1)


# ---------------------------- pure-JAX reference ----------------------------
def _reference(x_nchw, params, in_planes, growth_rate, layer_idx):
    g1, b1, w1_oihw, g2, b2, w2_oihw = params
    if layer_idx > 1:
        inp = jnp.concatenate(
            [x_nchw[:, :in_planes], x_nchw[:, -growth_rate:]], axis=1)
    else:
        inp = x_nchw

    def bn(v, g, b):
        m = jnp.mean(v, axis=(0, 2, 3), keepdims=True)
        var = jnp.mean((v - m) ** 2, axis=(0, 2, 3), keepdims=True)
        return ((v - m) / jnp.sqrt(var + _EPS)) * g.reshape(1, -1, 1, 1) \
            + b.reshape(1, -1, 1, 1)

    dn = ('NCHW', 'OIHW', 'NCHW')
    h1 = jax.nn.relu(bn(inp, g1, b1))
    y = jax.lax.conv_general_dilated(h1, w1_oihw, (1, 1), 'VALID',
                                     dimension_numbers=dn)
    h2 = jax.nn.relu(bn(y, g2, b2))
    out = jax.lax.conv_general_dilated(h2, w2_oihw, (1, 1),
                                       ((1, 1), (1, 1)), dimension_numbers=dn)
    return jnp.concatenate([x_nchw, out], axis=1)


if __name__ == "__main__":
    # Small DenseNet-style config: layer_idx=2 exercises the channel slicing.
    in_planes, growth_rate, layer_idx = 4, 4, 2
    input_planes = in_planes + growth_rate                             # 8
    C1 = 4 * growth_rate                                               # 16
    N, H, W = 2, 16, 16
    C_x = in_planes + 2 * growth_rate                                  # 12

    key = jax.random.PRNGKey(0)
    k = jax.random.split(key, 7)
    x = jax.random.normal(k[0], (N, C_x, H, W), jnp.float32)

    g1 = 1.0 + 0.1 * jax.random.normal(k[1], (input_planes,), jnp.float32)
    b1 = 0.1 * jax.random.normal(k[2], (input_planes,), jnp.float32)
    w1 = jax.random.normal(k[3], (C1, input_planes, 1, 1), jnp.float32) \
        * (1.0 / math.sqrt(input_planes))
    g2 = 1.0 + 0.1 * jax.random.normal(k[4], (C1,), jnp.float32)
    b2 = 0.1 * jax.random.normal(k[5], (C1,), jnp.float32)
    w2 = jax.random.normal(k[6], (growth_rate, C1, 3, 3), jnp.float32) \
        * (1.0 / math.sqrt(C1 * 9))
    params = (g1, b1, w1, g2, b2, w2)

    out = bottleneck_block(x, params, in_planes, growth_rate, layer_idx)
    out = jax.block_until_ready(out)

    ref = _reference(x, params, in_planes, growth_rate, layer_idx)
    assert out.shape == (N, C_x + growth_rate, H, W), out.shape
    err = float(jnp.max(jnp.abs(out - ref)))
    # Kernel uses bf16 MXU operands (reference is pure f32) -> bf16 tolerance.
    assert jnp.allclose(out, ref, rtol=5e-2, atol=5e-2), err

    print("KERNEL_OK")
</pallas_src>

<mosaic_0001>
module attributes {stable_mosaic.version = 11 : i64} {
  func.func @_xstats_kernel(%arg0: i32, %arg1: memref<1x8x256xf32, #tpu.memory_space<vmem>>, %arg2: memref<1x8x2xf32, #tpu.memory_space<vmem>>) attributes {dimension_semantics = [#tpu.dimension_semantics<parallel>], iteration_bounds = array<i64: 2>, scalar_prefetch = 0 : i64, scratch_operands = 0 : i64, tpu.core_type = #tpu.core_type<tc>, window_params = [{transform_indices = @transform_0, window_bounds = array<i64: 1, 8, 256>}, {transform_indices = @transform_1, window_bounds = array<i64: 1, 8, 2>}]} {
    %c0 = arith.constant 0 : index
    %c0_0 = arith.constant 0 : index
    %c0_1 = arith.constant 0 : index
    %0 = vector.load %arg1[%c0, %c0_0, %c0_1] : memref<1x8x256xf32, #tpu.memory_space<vmem>>, vector<1x8x256xf32>
    %1 = vector.shape_cast %0 : vector<1x8x256xf32> to vector<8x256xf32>
    %cst = arith.constant dense<0.000000e+00> : vector<8xf32>
    %2 = vector.multi_reduction <add>, %1, %cst [1] : vector<8x256xf32> to vector<8xf32>
    %3 = vector.shape_cast %2 : vector<8xf32> to vector<8x1xf32>
    %4 = arith.mulf %1, %1 : vector<8x256xf32>
    %cst_2 = arith.constant dense<0.000000e+00> : vector<8xf32>
    %5 = vector.multi_reduction <add>, %4, %cst_2 [1] : vector<8x256xf32> to vector<8xf32>
    %6 = vector.shape_cast %5 : vector<8xf32> to vector<8x1xf32>
    %7 = tpu.concatenate %3, %6 in 1 : vector<8x1xf32>, vector<8x1xf32> -> vector<8x2xf32>
    %c0_3 = arith.constant 0 : index
    %c0_4 = arith.constant 0 : index
    %c0_5 = arith.constant 0 : index
    %8 = vector.load %arg2[%c0_3, %c0_4, %c0_5] : memref<1x8x2xf32, #tpu.memory_space<vmem>>, vector<1x8x2xf32>
    %9 = vector.shape_cast %8 : vector<1x8x2xf32> to vector<8x2xf32>
    %10 = vector.shape_cast %7 : vector<8x2xf32> to vector<1x8x2xf32>
    tpu.vector_store %arg2[%c0_3, %c0_4, %c0_5], %10 {strides = array<i32>} : memref<1x8x2xf32, #tpu.memory_space<vmem>>, vector<1x8x2xf32>,
    return
  }
  func.func @transform_0(%arg0: i32) -> (i32, i32, i32) {
    %c0_i32 = arith.constant 0 : i32
    %c0_i32_0 = arith.constant 0 : i32
    %c0_i32_1 = arith.constant 0 : i32
    return %arg0, %c0_i32, %c0_i32_0 : i32, i32, i32
  }
  func.func @transform_1(%arg0: i32) -> (i32, i32, i32) {
    %c0_i32 = arith.constant 0 : i32
    %c0_i32_0 = arith.constant 0 : i32
    %c0_i32_1 = arith.constant 0 : i32
    return %arg0, %c0_i32, %c0_i32_0 : i32, i32, i32
  }
}

</mosaic_0001>

<llo_original>
// kernel: tpu_custom_call.1
$region0: #{tpu_custom_call.1}
  #allocation0 [shape = 'u32[]', space=smem, size = 0x4, offset = 0x4, fixed_abs, tag = 'smem constant byte address 0x4 - core index']
  #allocation1 [shape = 'u32[72,128]{1,0:T(1,128)}', space=vmem, size = 0x9000, scoped, tag = 'internal scratch']
  %s0 = inlined_call_operand.hbm [shape: f32[2,8,256], index: 0, kind: input, shape index: {}]
  %s1 = inlined_call_operand.vmem [shape: f32[2,8,2], index: 1, kind: output, shape index: {}]
  %s2 = sld [smem:[#allocation0]]
  $region41: #{tpu_custom_call.1} parent=0
    _
  %s4 = ssub.s32 1, %s2
  %s5 = scalar_select 0, %s4, %s2
  $region1: #{tpu_custom_call.1} parent=0
    #allocation2 [shape = 'u8[16384]{0}', space=vmem, size = 0x4000, scoped, tag = 'input window, operand 0']
    #allocation3 [shape = 's32[2]{0}', space=sflag, size = 0x8, scoped, tag = 'scoped memory for tpu_custom_call.1']
    %6 = vsyncpa [#allocation3], 0
    %s7 = scalar_lea.sflag [#allocation3], 1
    %8 = vsyncpa %s7, 0
    loop: start=0, step=1, limit=4
    $region2: #{tpu_custom_call.1} parent=1 // loop_pre_header
      _
    $region3: #{tpu_custom_call.1} parent=1 // loop_header
      %s10 = sphi 0, %s14
      %p11 = scmp.ge.s32.totalorder %s10, 4
      %s20 = sphi 0, %s22
      %s23 = sphi 0, %s20
      %s24 = sphi 0, %s23
      %s40 = sphi 0, %s24
      %s46 = sphi 0, %s48
      %s49 = sphi 0, %s46
      %s50 = sphi 0, %s49
      %s66 = sphi 0, %s50
    $region4: #{tpu_custom_call.1} parent=1 // loop_header_branch
      %13 = sbr.rel (%p11) target = $region8
    $region5: #{tpu_custom_call.1} parent=1 // loop_body
      %s15 = ssub.s32 %s10, 1
      %s16 = ssub.s32 %s10, 2
      %s17 = sadd.s32 %s10, 1
      %s18 = ssub.s32 %s10, %s17
      %p19 = scmp.eq.s32.totalorder %s18, 0
      %s21 = sadd.s32 %s20, 1
      %s22 = scalar_select %p19, %s20, %s21
      %p25 = pneg %p19
      %p26 = scmp.eq.s32.totalorder %s10, 1
      %p27 = por %p25, %p26
      %p28 = scmp.ne.s32.totalorder %s20, %s23
      %p29 = scmp.eq.s32.totalorder %s10, 0
      %p30 = por %p28, %p29
      %p31 = scmp.ne.s32.totalorder %s20, %s23
      %p32 = scmp.eq.s32.totalorder %s15, 1
      %p33 = por %p31, %p32
      %p34 = scmp.ne.s32.totalorder %s23, %s24
      %p35 = scmp.eq.s32.totalorder %s15, 0
      %p36 = por %p34, %p35
      %p37 = scmp.ne.s32.totalorder %s23, %s24
      %p38 = scmp.eq.s32.totalorder %s16, 1
      %p39 = por %p37, %p38
      %p41 = scmp.ne.s32.totalorder %s24, %s40
      %p42 = scmp.eq.s32.totalorder %s16, 0
      %p43 = por %p41, %p42
      %s44 = ssub.s32 %s10, %s17
      %p45 = scmp.eq.s32.totalorder %s44, 0
      %s47 = sadd.s32 %s46, 1
      %s48 = scalar_select %p45, %s46, %s47
      %p51 = pneg %p45
      %p52 = scmp.eq.s32.totalorder %s10, 1
      %p53 = por %p51, %p52
      %p54 = scmp.ne.s32.totalorder %s46, %s49
      %p55 = scmp.eq.s32.totalorder %s10, 0
      %p56 = por %p54, %p55
      %p57 = scmp.ne.s32.totalorder %s46, %s49
      %p58 = scmp.eq.s32.totalorder %s15, 1
      %p59 = por %p57, %p58
      %p60 = scmp.ne.s32.totalorder %s49, %s50
      %p61 = scmp.eq.s32.totalorder %s15, 0
      %p62 = por %p60, %p61
      %p63 = scmp.ne.s32.totalorder %s49, %s50
      %p64 = scmp.eq.s32.totalorder %s16, 1
      %p65 = por %p63, %p64
      %p67 = scmp.ne.s32.totalorder %s50, %s66
      %p68 = scmp.eq.s32.totalorder %s16, 0
      %p69 = por %p67, %p68
      %p70 = scmp.le.s32.totalorder 1, %s10
      %p71 = scmp.lt.s32.totalorder %s10, 3
      %p72 = pnand %p70, %p71
      %p73 = pneg %p72
      // Predicated region
      $region9: #{tpu_custom_call.1} parent=5 // pred_check
        _
      $region10: #{tpu_custom_call.1} parent=5 // pred_check_branch
        %75 = sbr.rel (%p72) target = $region12
      $region11: #{tpu_custom_call.1} parent=5 // pred_region
        %s76 = ssub.s32 %s10, 1
      $region12: #{tpu_custom_call.1} parent=5 // pred_fallthru
        _
      %p77 = scmp.lt.s32.totalorder %s10, 2
      // Predicated region
      $region13: #{tpu_custom_call.1} parent=5 // pred_check
        %p78 = pneg %p77
      $region14: #{tpu_custom_call.1} parent=5 // pred_check_branch
        %80 = sbr.rel (%p78) target = $region16
      $region15: #{tpu_custom_call.1} parent=5 // pred_region
        // Predicated region
        $region17: #{tpu_custom_call.1} parent=15 // pred_check
          %p81 = pneg %p30
        $region18: #{tpu_custom_call.1} parent=15 // pred_check_branch
          %83 = sbr.rel (%p81) target = $region20
        $region19: #{tpu_custom_call.1} parent=15 // pred_region
          %s84 = sand.u32 %s20, 1
          %s85 = scalar_lea.sflag [#allocation3], %s84
          %s86 = sand.u32 %s20, 1
          %s87 = smul.addr %s86, 16
          %s88 = scalar_lea.vmem [#allocation2], %s87
          %90 = vsyncadd %s85, 0
          %s91 = smul.addr %s10, 2
          %s92 = smul.addr %s91, 8
          %s93 = scalar_lea.hbm %s0, %s92
          %s95 = sshll.u32 %s93, 4
          %s96 = int_to_ptr.hbm [resolvable:$true] %s95
          %s97 = sshll.u32 %s88, 4
          %s98 = int_to_ptr.vmem [resolvable:$true] %s97
          %100 = dma.hbm_to_vmem [thread:$0]  %s96, 256, %s98, %s85
        $region20: #{tpu_custom_call.1} parent=15 // pred_fallthru
          _
      $region16: #{tpu_custom_call.1} parent=5 // pred_fallthru
        _
      %p101 = scmp.le.s32.totalorder 1, %s10
      %p102 = scmp.lt.s32.totalorder %s10, 3
      %p103 = pnand %p101, %p102
      %p104 = pneg %p103
      // Predicated region
      $region21: #{tpu_custom_call.1} parent=5 // pred_check
        _
      $region22: #{tpu_custom_call.1} parent=5 // pred_check_branch
        %106 = sbr.rel (%p103) target = $region24
      $region23: #{tpu_custom_call.1} parent=5 // pred_region
        %s107 = ssub.s32 %s10, 1
        %s108 = sand.u32 %s23, 1
        %s109 = scalar_lea.sflag [#allocation3], %s108
        %s110 = sand.u32 %s23, 1
        %s111 = smul.addr %s110, 16
        %s112 = scalar_lea.vmem [#allocation2], %s111
        // Predicated region
        $region25: #{tpu_custom_call.1} parent=23 // pred_check
          %p113 = pneg %p36
        $region26: #{tpu_custom_call.1} parent=23 // pred_check_branch
          %115 = sbr.rel (%p113) target = $region28
        $region27: #{tpu_custom_call.1} parent=23 // pred_region
          %117 = dma.done %s109, 256
        $region28: #{tpu_custom_call.1} parent=23 // pred_fallthru
          _
        %s118 = sand.u32 %s23, 1
        %s119 = scalar_lea.sflag [#allocation3], %s118
        %s120 = sand.u32 %s23, 1
        %s121 = smul.addr %s120, 16
        %s122 = scalar_lea.vmem [#allocation2], %s121
        %p123 = pneg %p36
        %p124 = pneg %p33
        %p125 = pneg %p62
        %p126 = pneg %p59
        %p127 = scmp.lt.s32.totalorder %s15, 1
        %s128 = scalar_select %p127, %s15, 1
        %s129 = smul.addr %s128, 8
        %s130 = scalar_lea.vmem %s1, %s129
        %p131 = scmp.lt.s32.totalorder %s15, 1
        %s132 = scalar_select %p131, %s15, 1
        %s133 = smul.addr %s132, 8
        %s134 = scalar_lea.vmem %s1, %s133
        %v135 = vld [vmem:[%s112] sm:$0xff]
        %v136 = vld [vmem:[%s112 + $0x8] sm:$0xff]
        %v137 = vadd.f32 %v135, %v136
        %138 = vadd.xlane.f32.xlu0 %v137
        %v139 = vpop.xlane.xlu0 %138
        %v140 = vmul.f32 %v135, %v135
        %v141 = vmul.f32 %v136, %v136
        %v142 = vadd.f32 %v140, %v141
        %143 = vadd.xlane.f32.xlu0 %v142
        %v144 = vpop.xlane.xlu0 %143
        %vm145 = vcmask 7168
        %v146 = vsel %vm145, %v139, %v144
        %vm147 = vcmask 15360
        %148 = vst.msk [vmem:[%s134] sm:$0xff] %vm147, %v146
        %p149 = scmp.lt.s32.totalorder %s15, 1
        %s150 = scalar_select %p149, %s15, 1
        %s151 = smul.addr %s150, 8
        %s152 = scalar_lea.vmem %s1, %s151
        // Predicated region
        $region29: #{tpu_custom_call.1} parent=23 // pred_check
          %p153 = pneg %p59
        $region30: #{tpu_custom_call.1} parent=23 // pred_check_branch
          %155 = sbr.rel (%p153) target = $region32
        $region31: #{tpu_custom_call.1} parent=23 // pred_region
          _
        $region32: #{tpu_custom_call.1} parent=23 // pred_fallthru
          _
      $region24: #{tpu_custom_call.1} parent=5 // pred_fallthru
        _
      %p156 = scmp.le.s32.totalorder 2, %s10
      // Predicated region
      $region33: #{tpu_custom_call.1} parent=5 // pred_check
        %p157 = pneg %p156
      $region34: #{tpu_custom_call.1} parent=5 // pred_check_branch
        %159 = sbr.rel (%p157) target = $region36
      $region35: #{tpu_custom_call.1} parent=5 // pred_region
        %s160 = ssub.s32 %s10, 2
        // Predicated region
        $region37: #{tpu_custom_call.1} parent=35 // pred_check
          %p161 = pneg %p65
        $region38: #{tpu_custom_call.1} parent=35 // pred_check_branch
          %163 = sbr.rel (%p161) target = $region40
        $region39: #{tpu_custom_call.1} parent=35 // pred_region
          %p164 = scmp.lt.s32.totalorder %s16, 1
          %s165 = scalar_select %p164, %s16, 1
          %s166 = smul.addr %s165, 8
          %s167 = scalar_lea.vmem %s1, %s166
        $region40: #{tpu_custom_call.1} parent=35 // pred_fallthru
          _
      $region36: #{tpu_custom_call.1} parent=5 // pred_fallthru
        _
    $region6: #{tpu_custom_call.1} parent=1 // loop_footer
      %s14 = sadd.s32 1, %s10
    $region7: #{tpu_custom_call.1} parent=1 // loop_footer_branch
      %9 = sbr.rel target = $region3
    $region8: #{tpu_custom_call.1} parent=1 // loop_exit
      _
    %168 = vsyncpa [#allocation3], 1
    %s169 = scalar_lea.sflag [#allocation3], 1
    %170 = vsyncpa %s169, 1

</llo_original>
